<compile_context>
chip_gen: v7x
topology: tpu7x:2x2x1
jax: 0.10.0
libtpu: 0.0.40
codegen_flags: <defaults>
</compile_context>

<pallas_src>
import math

import jax
import jax.numpy as jnp
from jax.experimental import pallas as pl
from jax.experimental.pallas import tpu as pltpu


def _round_up(x, m):
    return ((x + m - 1) // m) * m


def _vmem_capacity_bytes():
    """Physical VMEM of the local TPU generation (fallback: v7x's 64 MiB)."""
    try:
        return int(pltpu.get_tpu_info().vmem_capacity_bytes)
    except Exception:
        return 64 << 20  # most conservative across v5e/v6e/v7x


# ----------------------------- Phase 1: X @ W ------------------------------
def support_kernel(x_ref, w_ref, s_ref):
    # X tile arrives f32 (no wrapper cast pass); cast to bf16 on the VPU,
    # accumulate on the MXU in f32, store bf16 for phase 2.
    s_ref[...] = jnp.dot(
        x_ref[...].astype(w_ref.dtype), w_ref[...],
        preferred_element_type=jnp.float32,
    ).astype(s_ref.dtype)


# ------------------------ Phase 2: adj @ support + b ------------------------
def _make_p2_kernel(has_bias, resident_support, tile_k):
    """adj @ support (+bias), accumulating directly into the resident out tile.

    resident_support=True : support ref holds the full (n_p, f_out_p) matrix
                            (constant index_map -> DMA'd from HBM once); the
                            kernel slices the k-th (tile_k, f_out_p) panel.
    resident_support=False: support ref is the streamed (tile_k, f_out_p) block.
    """

    def kernel(adj_ref, s_ref, *rest):
        if has_bias:
            b_ref, o_ref = rest
        else:
            (o_ref,) = rest
        k = pl.program_id(1)

        @pl.when(k == 0)
        def _():
            o_ref[...] = jnp.zeros_like(o_ref)

        if resident_support:
            start = pl.multiple_of(k * tile_k, 128)
            s_blk = s_ref[pl.ds(start, tile_k), :]
        else:
            s_blk = s_ref[...]

        # adj tile is f32 in HBM/VMEM; cast to bf16 here (free VPU work hidden
        # under the MXU) instead of a separate wrapper-side pad/cast pass.
        o_ref[...] += jnp.dot(
            adj_ref[...].astype(s_blk.dtype), s_blk,
            preferred_element_type=jnp.float32,
        )

        if has_bias:
            @pl.when(k == pl.num_programs(1) - 1)
            def _():
                o_ref[...] += b_ref[...]

    return kernel


def gcn_forward(x, adj, weight, bias=None):
    """Fused dense GCN layer: adj @ (x @ weight) + bias."""
    n, f_in = x.shape
    f_out = weight.shape[1]
    lane = 128

    f_in_p = _round_up(f_in, lane)
    f_out_p = _round_up(f_out, lane)

    # ------------- per-generation VMEM budget & tile selection -------------
    phys_vmem = _vmem_capacity_bytes()          # 128 MiB v5e/v6e, 64 MiB v7x
    vmem_limit = min(phys_vmem // 2, 100 << 20)  # requested scoped VMEM
    budget = int(vmem_limit * 0.9)               # planning headroom

    n_al = _round_up(n, lane)
    if n_al >= 1024:
        tile_m, tile_k = 512, 512
        n_p = _round_up(n, 512)
    else:
        n_p = n_al
        tile_k = n_p
        # Keep >= 2 row tiles when possible so v7x's two TensorCores both work.
        tile_m = n_p // 2 if n_p >= 256 else n_p

    def p2_usage(resident, tm, tk):
        u = 2 * tm * tk * 4              # adj tile, f32, double-buffered
        u += 2 * tm * f_out_p * 4        # out tile, f32, double-buffered
        u += 2 * 8 * f_out_p * 4         # bias block (sublane-padded), tiny
        if resident:
            u += 2 * n_p * f_out_p * 2   # resident support bf16 (counted 2x, conservative)
        else:
            u += 2 * tk * f_out_p * 2    # streamed support block bf16
        return u

    resident_support = p2_usage(True, tile_m, tile_k) <= budget
    if not resident_support:
        # Streamed-support fallback; shrink tiles only while shapes stay legal.
        while (p2_usage(False, tile_m, tile_k) > budget
               and tile_k % 256 == 0 and tile_k > 128):
            tile_k //= 2
        while (p2_usage(False, tile_m, tile_k) > budget
               and tile_m % 16 == 0 and tile_m > 128):
            tile_m //= 2

    # Phase-1 row tile: phase 1 is memory-bound, so go big (W stays resident).
    if n_p <= 1024:
        tile_m1 = n_p
    else:
        tile_m1 = 1024 if n_p % 1024 == 0 else 512

    def p1_usage(tm):
        return (2 * f_in_p * f_out_p * 2   # resident W bf16 (2x, conservative)
                + 2 * tm * f_in_p * 4      # X tile f32, double-buffered
                + 2 * tm * f_out_p * 2)    # support tile bf16, double-buffered

    while p1_usage(tile_m1) > budget and tile_m1 % 256 == 0 and tile_m1 > 128:
        tile_m1 //= 2
    # TODO(synk): if F_in/F_out grow so large that W alone busts VMEM, tile W too.

    # ----------------------- padding (skip when aligned) -------------------
    def pad2(a, rows, cols):
        pr, pc = rows - a.shape[0], cols - a.shape[1]
        return a if (pr == 0 and pc == 0) else jnp.pad(a, ((0, pr), (0, pc)))

    # X and adj stay f32 (cast happens in-kernel); only the small, resident W
    # (and the tiny bias) are cast on the host side.
    x_p = pad2(x.astype(jnp.float32), n_p, f_in_p)
    adj_p = pad2(adj.astype(jnp.float32), n_p, n_p)
    w_p = pad2(weight.astype(jnp.float32), f_in_p, f_out_p).astype(jnp.bfloat16)
    has_bias = bias is not None
    if has_bias:
        b_p = jnp.pad(bias.astype(jnp.float32), (0, f_out_p - f_out))
        b_p = b_p.reshape(1, f_out_p)

    # --------------------------- Phase 1: X @ W ----------------------------
    support = pl.pallas_call(
        support_kernel,
        out_shape=jax.ShapeDtypeStruct((n_p, f_out_p), jnp.bfloat16),
        grid_spec=pltpu.PrefetchScalarGridSpec(
            num_scalar_prefetch=0,
            grid=(n_p // tile_m1,),
            in_specs=[
                pl.BlockSpec((tile_m1, f_in_p), lambda i: (i, 0)),
                pl.BlockSpec((f_in_p, f_out_p), lambda i: (0, 0)),  # resident W
            ],
            out_specs=pl.BlockSpec((tile_m1, f_out_p), lambda i: (i, 0)),
        ),
        compiler_params=pltpu.CompilerParams(
            dimension_semantics=("parallel",),
            vmem_limit_bytes=vmem_limit,
        ),
        cost_estimate=pl.CostEstimate(
            flops=2 * n_p * f_in_p * f_out_p,
            transcendentals=0,
            bytes_accessed=(4 * n_p * f_in_p            # X read (f32)
                            + 2 * f_in_p * f_out_p      # W read once (bf16)
                            + 2 * n_p * f_out_p),       # support write (bf16)
        ),
    )(x_p, w_p)

    # ---------------------- Phase 2: adj @ support + b ---------------------
    n_row = n_p // tile_m
    n_ksteps = n_p // tile_k

    if resident_support:
        s_spec = pl.BlockSpec((n_p, f_out_p), lambda i, k: (0, 0))
        support_bytes = 2 * n_p * f_out_p                 # read once
    else:
        s_spec = pl.BlockSpec((tile_k, f_out_p), lambda i, k: (k, 0))
        support_bytes = 2 * n_p * f_out_p * n_row         # re-read per row tile

    in_specs = [pl.BlockSpec((tile_m, tile_k), lambda i, k: (i, k)), s_spec]
    operands = [adj_p, support]
    if has_bias:
        in_specs.append(pl.BlockSpec((1, f_out_p), lambda i, k: (0, 0)))
        operands.append(b_p)

    out_p = pl.pallas_call(
        _make_p2_kernel(has_bias, resident_support, tile_k),
        out_shape=jax.ShapeDtypeStruct((n_p, f_out_p), jnp.float32),
        grid_spec=pltpu.PrefetchScalarGridSpec(
            num_scalar_prefetch=0,
            grid=(n_row, n_ksteps),
            in_specs=in_specs,
            out_specs=pl.BlockSpec((tile_m, f_out_p), lambda i, k: (i, 0)),
        ),
        compiler_params=pltpu.CompilerParams(
            dimension_semantics=("parallel", "arbitrary"),
            vmem_limit_bytes=vmem_limit,
        ),
        cost_estimate=pl.CostEstimate(
            flops=2 * n_p * n_p * f_out_p,
            transcendentals=0,
            bytes_accessed=(4 * n_p * n_p                # adj read (f32, once)
                            + support_bytes              # honest support reads
                            + 4 * n_p * f_out_p),        # output write (f32)
        ),
    )(*operands)

    return out_p[:n, :f_out]


def init_gcn_params(key, in_count, out_count):
    # Matches GCN.rest_parameters(): uniform(-stdv, stdv), stdv = 1/sqrt(out_count)
    stdv = 1.0 / math.sqrt(out_count)
    kw, kb = jax.random.split(key)
    weight = jax.random.uniform(
        kw, (in_count, out_count), jnp.float32, minval=-stdv, maxval=stdv
    )
    bias = jax.random.uniform(
        kb, (out_count,), jnp.float32, minval=-stdv, maxval=stdv
    )
    return weight, bias


if __name__ == "__main__":
    def run_case(n, in_count, out_count, key, check_no_bias=False):
        k_x, k_adj, k_param = jax.random.split(key, 3)
        x = jax.random.normal(k_x, (n, in_count), jnp.float32)

        # Dense symmetric row-normalized adjacency (spmm -> dense matmul here).
        a = (jax.random.uniform(k_adj, (n, n)) > 0.5).astype(jnp.float32)
        adj = a + a.T + jnp.eye(n, dtype=jnp.float32)
        adj = adj / jnp.sum(adj, axis=1, keepdims=True)

        weight, bias = init_gcn_params(k_param, in_count, out_count)

        out = gcn_forward(x, adj, weight, bias)
        jax.block_until_ready(out)
        ref = adj @ (x @ weight) + bias
        assert out.shape == (n, out_count)
        assert jnp.allclose(out, ref, atol=2e-2, rtol=2e-2)

        if check_no_bias:
            out_nb = gcn_forward(x, adj, weight, None)
            jax.block_until_ready(out_nb)
            ref_nb = adj @ (x @ weight)
            assert jnp.allclose(out_nb, ref_nb, atol=2e-2, rtol=2e-2)

    key = jax.random.PRNGKey(0)
    k1, k2 = jax.random.split(key)
    # Tiny, module-consistent shapes (single-tile path) + bias=None path.
    run_case(8, 16, 32, k1, check_no_bias=True)
    # Padded, multi-row-tile path (exercises 2 row tiles / resident support).
    run_case(384, 96, 160, k2)

    print("KERNEL_OK")
</pallas_src>

<mosaic_0001>
module attributes {stable_mosaic.version = 11 : i64} {
  func.func @support_kernel(%arg0: i32, %arg1: memref<128x128xf32, #tpu.memory_space<vmem>>, %arg2: memref<128x128xbf16, #tpu.memory_space<vmem>>, %arg3: memref<128x128xbf16, #tpu.memory_space<vmem>>) attributes {dimension_semantics = [#tpu.dimension_semantics<parallel>], iteration_bounds = array<i64: 1>, scalar_prefetch = 0 : i64, scratch_operands = 0 : i64, tpu.core_type = #tpu.core_type<tc>, window_params = [{transform_indices = @transform_0, window_bounds = array<i64: 128, 128>}, {pipeline_mode = #tpu.pipeline_mode<synchronous>, transform_indices = @transform_1, window_bounds = array<i64: 128, 128>}, {transform_indices = @transform_2, window_bounds = array<i64: 128, 128>}]} {
    %c0 = arith.constant 0 : index
    %c0_0 = arith.constant 0 : index
    %0 = vector.load %arg1[%c0, %c0_0] : memref<128x128xf32, #tpu.memory_space<vmem>>, vector<128x128xf32>
    %1 = arith.truncf %0 : vector<128x128xf32> to vector<128x128xbf16>
    %c0_1 = arith.constant 0 : index
    %c0_2 = arith.constant 0 : index
    %2 = vector.load %arg2[%c0_1, %c0_2] : memref<128x128xbf16, #tpu.memory_space<vmem>>, vector<128x128xbf16>
    %cst = arith.constant dense<0.000000e+00> : vector<128x128xf32>
    %3 = tpu.matmul %1, %2, %cst {dimension_numbers = #tpu.dot_dimension_numbers<[1], [0], [0], [1], [0, 0, 1, 1], [], []>} : vector<128x128xbf16>, vector<128x128xbf16>, vector<128x128xf32> -> vector<128x128xf32>
    %4 = arith.truncf %3 : vector<128x128xf32> to vector<128x128xbf16>
    %c0_3 = arith.constant 0 : index
    %c0_4 = arith.constant 0 : index
    %5 = vector.load %arg3[%c0_3, %c0_4] : memref<128x128xbf16, #tpu.memory_space<vmem>>, vector<128x128xbf16>
    tpu.vector_store %arg3[%c0_3, %c0_4], %4 {strides = array<i32>} : memref<128x128xbf16, #tpu.memory_space<vmem>>, vector<128x128xbf16>,
    return
  }
  func.func @transform_0(%arg0: i32) -> (i32, i32) {
    %c0_i32 = arith.constant 0 : i32
    %c0_i32_0 = arith.constant 0 : i32
    return %arg0, %c0_i32 : i32, i32
  }
  func.func @transform_1(%arg0: i32) -> (i32, i32) {
    %c0_i32 = arith.constant 0 : i32
    %c0_i32_0 = arith.constant 0 : i32
    %c0_i32_1 = arith.constant 0 : i32
    return %c0_i32, %c0_i32_0 : i32, i32
  }
  func.func @transform_2(%arg0: i32) -> (i32, i32) {
    %c0_i32 = arith.constant 0 : i32
    %c0_i32_0 = arith.constant 0 : i32
    return %arg0, %c0_i32 : i32, i32
  }
}

</mosaic_0001>

<llo_original>
// kernel: tpu_custom_call.1
$region0: #{tpu_custom_call.1}
  #allocation0 [shape = 'u32[]', space=smem, size = 0x4, offset = 0x4, fixed_abs, tag = 'smem constant byte address 0x4 - core index']
  #allocation1 [shape = 'u32[144,128]{1,0:T(1,128)}', space=vmem, size = 0x12000, scoped, tag = 'internal scratch']
  %s0 = inlined_call_operand.hbm [shape: f32[128,128], index: 0, kind: input, shape index: {}]
  %s1 = inlined_call_operand.hbm [shape: bf16[128,128], index: 1, kind: input, shape index: {}]
  %s2 = inlined_call_operand.hbm [shape: bf16[128,128], index: 2, kind: output, shape index: {}]
  %s3 = sld [smem:[#allocation0]]
  $region26: #{tpu_custom_call.1} parent=0
    _
  %s5 = ssub.s32 1, %s3
  %s6 = scalar_select 0, %s5, %s3
  $region1: #{tpu_custom_call.1} parent=0
    #allocation2 [shape = 'u8[65536]{0}', space=vmem, size = 0x10000, scoped, tag = 'input window, operand 0, single buffered']
    #allocation3 [shape = 's32[1]{0}', space=sflag, size = 0x4, scoped, tag = 'scoped memory for tpu_custom_call.1']
    #allocation4 [shape = 's32[1]{0}', space=sflag, size = 0x4, scoped, tag = 'scoped memory for tpu_custom_call.1']
    #allocation5 [shape = 'u8[32768]{0}', space=vmem, size = 0x8000, scoped, tag = 'input window, operand 1, single buffered']
    #allocation6 [shape = 's32[1]{0}', space=sflag, size = 0x4, scoped, tag = 'scoped memory for tpu_custom_call.1']
    #allocation7 [shape = 'u8[32768]{0}', space=vmem, size = 0x8000, scoped, tag = 'output window, operand 0, single buffered']
    %7 = vsyncpa [#allocation3], 0
    %8 = vsyncpa [#allocation6], 0
    %9 = vsyncpa [#allocation4], 0
    // Predicated region
    $region2: #{tpu_custom_call.1} parent=1 // pred_check
      _
    $region3: #{tpu_custom_call.1} parent=1 // pred_check_branch
      %11 = sbr.rel (0) target = $region5
    $region4: #{tpu_custom_call.1} parent=1 // pred_region
      %s13 = ssub.s32 2048, 2048
      %14 = vsyncadd [#allocation3], %s13
      %s15 = sshll.u32 [#allocation2], 4
      %s16 = int_to_ptr.vmem [resolvable:$true] %s15
      %21 = dma.hbm_to_vmem [thread:$0]  %s0, 2048, %s16, [#allocation3], 128, 128, 8
    $region5: #{tpu_custom_call.1} parent=1 // pred_fallthru
      _
    // Predicated region
    $region6: #{tpu_custom_call.1} parent=1 // pred_check
      _
    $region7: #{tpu_custom_call.1} parent=1 // pred_check_branch
      %23 = sbr.rel (0) target = $region9
    $region8: #{tpu_custom_call.1} parent=1 // pred_region
      %s25 = ssub.s32 1024, 1024
      %26 = vsyncadd [#allocation6], %s25
      %s27 = sshll.u32 [#allocation5], 4
      %s28 = int_to_ptr.vmem [resolvable:$true] %s27
      %33 = dma.hbm_to_vmem [thread:$0]  %s1, 1024, %s28, [#allocation6], 64, 64, 4
    $region9: #{tpu_custom_call.1} parent=1 // pred_fallthru
      _
    // Predicated region
    $region10: #{tpu_custom_call.1} parent=1 // pred_check
      _
    $region11: #{tpu_custom_call.1} parent=1 // pred_check_branch
      %35 = sbr.rel (0) target = $region13
    $region12: #{tpu_custom_call.1} parent=1 // pred_region
      %36 = dma.done [#allocation3], 2048
    $region13: #{tpu_custom_call.1} parent=1 // pred_fallthru
      _
    // Predicated region
    $region14: #{tpu_custom_call.1} parent=1 // pred_check
      _
    $region15: #{tpu_custom_call.1} parent=1 // pred_check_branch
      %38 = sbr.rel (0) target = $region17
    $region16: #{tpu_custom_call.1} parent=1 // pred_region
      %39 = dma.done [#allocation6], 1024
    $region17: #{tpu_custom_call.1} parent=1 // pred_fallthru
      _
    %v41 = vld [vmem:[#allocation2] sm:$0xff]
    %v42 = vld [vmem:[#allocation2 + $0x8] sm:$0xff]
    %v43 = vld [vmem:[#allocation2 + $0x10] sm:$0xff]
    %v44 = vld [vmem:[#allocation2 + $0x18] sm:$0xff]
    %v45 = vld [vmem:[#allocation2 + $0x20] sm:$0xff]
    %v46 = vld [vmem:[#allocation2 + $0x28] sm:$0xff]
    %v47 = vld [vmem:[#allocation2 + $0x30] sm:$0xff]
    %v48 = vld [vmem:[#allocation2 + $0x38] sm:$0xff]
    %v49 = vld [vmem:[#allocation2 + $0x40] sm:$0xff]
    %v50 = vld [vmem:[#allocation2 + $0x48] sm:$0xff]
    %v51 = vld [vmem:[#allocation2 + $0x50] sm:$0xff]
    %v52 = vld [vmem:[#allocation2 + $0x58] sm:$0xff]
    %v53 = vld [vmem:[#allocation2 + $0x60] sm:$0xff]
    %v54 = vld [vmem:[#allocation2 + $0x68] sm:$0xff]
    %v55 = vld [vmem:[#allocation2 + $0x70] sm:$0xff]
    %v56 = vld [vmem:[#allocation2 + $0x78] sm:$0xff]
    %v57 = vpack.c.bf16 %v42, %v41
    %v58 = vpack.c.bf16 %v44, %v43
    %v59 = vpack.c.bf16 %v46, %v45
    %v60 = vpack.c.bf16 %v48, %v47
    %v61 = vpack.c.bf16 %v50, %v49
    %v62 = vpack.c.bf16 %v52, %v51
    %v63 = vpack.c.bf16 %v54, %v53
    %v64 = vpack.c.bf16 %v56, %v55
    %v65 = vld [vmem:[#allocation5] sm:$0xf]
    %v66 = vld [vmem:[#allocation5 + $0x4] sm:$0xf]
    %v67 = vld [vmem:[#allocation5 + $0x8] sm:$0xf]
    %v68 = vld [vmem:[#allocation5 + $0xc] sm:$0xf]
    %v69 = vld [vmem:[#allocation5 + $0x10] sm:$0xf]
    %v70 = vld [vmem:[#allocation5 + $0x14] sm:$0xf]
    %v71 = vld [vmem:[#allocation5 + $0x18] sm:$0xf]
    %v72 = vld [vmem:[#allocation5 + $0x1c] sm:$0xf]
    %v73 = vld [vmem:[#allocation5 + $0x20] sm:$0xf]
    %v74 = vld [vmem:[#allocation5 + $0x24] sm:$0xf]
    %v75 = vld [vmem:[#allocation5 + $0x28] sm:$0xf]
    %v76 = vld [vmem:[#allocation5 + $0x2c] sm:$0xf]
    %v77 = vld [vmem:[#allocation5 + $0x30] sm:$0xf]
    %v78 = vld [vmem:[#allocation5 + $0x34] sm:$0xf]
    %v79 = vld [vmem:[#allocation5 + $0x38] sm:$0xf]
    %v80 = vld [vmem:[#allocation5 + $0x3c] sm:$0xf]
    %v97 = vunpack.c.l.b16 %v65
    %v98 = vunpack.c.l.b16 %v66
    %v99 = vunpack.c.l.b16 %v67
    %v100 = vunpack.c.l.b16 %v68
    %v101 = vunpack.c.l.b16 %v69
    %v102 = vunpack.c.l.b16 %v70
    %v103 = vunpack.c.l.b16 %v71
    %v104 = vunpack.c.l.b16 %v72
    %v105 = vunpack.c.l.b16 %v73
    %v106 = vunpack.c.l.b16 %v74
    %v107 = vunpack.c.l.b16 %v75
    %v108 = vunpack.c.l.b16 %v76
    %v109 = vunpack.c.l.b16 %v77
    %v110 = vunpack.c.l.b16 %v78
    %v111 = vunpack.c.l.b16 %v79
    %v112 = vunpack.c.l.b16 %v80
    %v113 = vpack.c.b16 %v98, %v97
    %v114 = vpack.c.b16 %v100, %v99
    %v115 = vpack.c.b16 %v102, %v101
    %v116 = vpack.c.b16 %v104, %v103
    %v117 = vpack.c.b16 %v106, %v105
    %v118 = vpack.c.b16 %v108, %v107
    %v119 = vpack.c.b16 %v110, %v109
    %v120 = vpack.c.b16 %v112, %v111
    %129 = vmatprep.subr.bf16.mxu0 0
    %130 = vmatpush1.bf16.msra.mxu0 %v113
    %131 = vmatprep.subr.bf16.mxu0 0
    %132 = vmatpush1.bf16.msra.mxu0 %v114
    %133 = vmatprep.subr.bf16.mxu0 0
    %134 = vmatpush1.bf16.msra.mxu0 %v115
    %135 = vmatprep.subr.bf16.mxu0 0
    %136 = vmatpush1.bf16.msra.mxu0 %v116
    %137 = vmatprep.subr.bf16.mxu0 0
    %138 = vmatpush1.bf16.msra.mxu0 %v117
    %139 = vmatprep.subr.bf16.mxu0 0
    %140 = vmatpush1.bf16.msra.mxu0 %v118
    %141 = vmatprep.subr.bf16.mxu0 0
    %142 = vmatpush1.bf16.msra.mxu0 %v119
    %143 = vmatprep.subr.bf16.mxu0 0
    %144 = vmatpush1.bf16.msra.mxu0 %v120
    %145 = vmatprep.subr.bf16.mxu0 0
    %146 = vmatpush1.bf16.msra.mxu0 0
    %147 = vmatprep.subr.bf16.mxu0 0
    %148 = vmatpush1.bf16.msra.mxu0 0
    %149 = vmatprep.subr.bf16.mxu0 0
    %150 = vmatpush1.bf16.msra.mxu0 0
    %151 = vmatprep.subr.bf16.mxu0 0
    %152 = vmatpush1.bf16.msra.mxu0 0
    %153 = vmatprep.subr.bf16.mxu0 0
    %154 = vmatpush1.bf16.msra.mxu0 0
    %155 = vmatprep.subr.bf16.mxu0 0
    %156 = vmatpush1.bf16.msra.mxu0 0
    %157 = vmatprep.subr.bf16.mxu0 0
    %158 = vmatpush1.bf16.msra.mxu0 0
    %159 = vmatprep.subr.bf16.mxu0 0
    %160 = vmatpush1.bf16.msra.mxu0 0
    %161 = vmatprep.mubr.bf16.mxu0 0
    %162 = vmatmul.mubr.bf16.gmra.mrb[0].mxu0 %v57
    %v163 = vpop.f32.mrb[0].mxu0
    %v164 = vadd.f32 0.0, %v163
    %v165 = vpop.f32.mrb[0].mxu0
    %v166 = vpop.f32.mrb[0].mxu0
    %v167 = vadd.f32 0.0, %v166
    %v168 = vpop.f32.mrb[0].mxu0
    %169 = vmatprep.mubr.bf16.mxu0 0
    %170 = vmatmul.mubr.bf16.gmra.mrb[0].mxu0 %v58
    %v171 = vpop.f32.mrb[0].mxu0
    %v172 = vadd.f32 0.0, %v171
    %v173 = vpop.f32.mrb[0].mxu0
    %v174 = vpop.f32.mrb[0].mxu0
    %v175 = vadd.f32 0.0, %v174
    %v176 = vpop.f32.mrb[0].mxu0
    %177 = vmatprep.mubr.bf16.mxu0 0
    %178 = vmatmul.mubr.bf16.gmra.mrb[0].mxu0 %v59
    %v179 = vpop.f32.mrb[0].mxu0
    %v180 = vadd.f32 0.0, %v179
    %v181 = vpop.f32.mrb[0].mxu0
    %v182 = vpop.f32.mrb[0].mxu0
    %v183 = vadd.f32 0.0, %v182
    %v184 = vpop.f32.mrb[0].mxu0
    %185 = vmatprep.mubr.bf16.mxu0 0
    %186 = vmatmul.mubr.bf16.gmra.mrb[0].mxu0 %v60
    %v187 = vpop.f32.mrb[0].mxu0
    %v188 = vadd.f32 0.0, %v187
    %v189 = vpop.f32.mrb[0].mxu0
    %v190 = vpop.f32.mrb[0].mxu0
    %v191 = vadd.f32 0.0, %v190
    %v192 = vpop.f32.mrb[0].mxu0
    %193 = vmatprep.mubr.bf16.mxu0 0
    %194 = vmatmul.mubr.bf16.gmra.mrb[0].mxu0 %v61
    %v195 = vpop.f32.mrb[0].mxu0
    %v196 = vadd.f32 0.0, %v195
    %v197 = vpop.f32.mrb[0].mxu0
    %v198 = vpop.f32.mrb[0].mxu0
    %v199 = vadd.f32 0.0, %v198
    %v200 = vpop.f32.mrb[0].mxu0
    %201 = vmatprep.mubr.bf16.mxu0 0
    %202 = vmatmul.mubr.bf16.gmra.mrb[0].mxu0 %v62
    %v203 = vpop.f32.mrb[0].mxu0
    %v204 = vadd.f32 0.0, %v203
    %v205 = vpop.f32.mrb[0].mxu0
    %v206 = vpop.f32.mrb[0].mxu0
    %v207 = vadd.f32 0.0, %v206
    %v208 = vpop.f32.mrb[0].mxu0
    %209 = vmatprep.mubr.bf16.mxu0 0
    %210 = vmatmul.mubr.bf16.gmra.mrb[0].mxu0 %v63
    %v211 = vpop.f32.mrb[0].mxu0
    %v212 = vadd.f32 0.0, %v211
    %v213 = vpop.f32.mrb[0].mxu0
    %v214 = vpop.f32.mrb[0].mxu0
    %v215 = vadd.f32 0.0, %v214
    %v216 = vpop.f32.mrb[0].mxu0
    %217 = vmatprep.mubr.bf16.mxu0 0
    %218 = vmatmul.mubr.bf16.gmra.mrb[0].mxu0 %v64
    %v219 = vpop.f32.mrb[0].mxu0
    %v220 = vadd.f32 0.0, %v219
    %v221 = vpop.f32.mrb[0].mxu0
    %v222 = vpop.f32.mrb[0].mxu0
    %v223 = vadd.f32 0.0, %v222
    %v224 = vpop.f32.mrb[0].mxu0
    %225 = vdwg.mxu0
    %v226 = vpack.c.bf16 %v167, %v164
    %v227 = vpack.c.bf16 %v175, %v172
    %v228 = vpack.c.bf16 %v183, %v180
    %v229 = vpack.c.bf16 %v191, %v188
    %v230 = vpack.c.bf16 %v199, %v196
    %v231 = vpack.c.bf16 %v207, %v204
    %v232 = vpack.c.bf16 %v215, %v212
    %v233 = vpack.c.bf16 %v223, %v220
    %v242 = vunpack.c.l.b16 %v226
    %v243 = vunpack.c.h.b16 %v226
    %v244 = vunpack.c.l.b16 %v227
    %v245 = vunpack.c.h.b16 %v227
    %v246 = vunpack.c.l.b16 %v228
    %v247 = vunpack.c.h.b16 %v228
    %v248 = vunpack.c.l.b16 %v229
    %v249 = vunpack.c.h.b16 %v229
    %v250 = vunpack.c.l.b16 %v230
    %v251 = vunpack.c.h.b16 %v230
    %v252 = vunpack.c.l.b16 %v231
    %v253 = vunpack.c.h.b16 %v231
    %v254 = vunpack.c.l.b16 %v232
    %v255 = vunpack.c.h.b16 %v232
    %v256 = vunpack.c.l.b16 %v233
    %v257 = vunpack.c.h.b16 %v233
    %v258 = vpack.c.b16 %v242, %v242
    %v259 = vpack.c.b16 %v243, %v243
    %v260 = vpack.c.b16 %v244, %v244
    %v261 = vpack.c.b16 %v245, %v245
    %v262 = vpack.c.b16 %v246, %v246
    %v263 = vpack.c.b16 %v247, %v247
    %v264 = vpack.c.b16 %v248, %v248
    %v265 = vpack.c.b16 %v249, %v249
    %v266 = vpack.c.b16 %v250, %v250
    %v267 = vpack.c.b16 %v251, %v251
    %v268 = vpack.c.b16 %v252, %v252
    %v269 = vpack.c.b16 %v253, %v253
    %v270 = vpack.c.b16 %v254, %v254
    %v271 = vpack.c.b16 %v255, %v255
    %v272 = vpack.c.b16 %v256, %v256
    %v273 = vpack.c.b16 %v257, %v257
    %290 = vst [vmem:[#allocation7] sm:$0xf] %v258
    %291 = vst [vmem:[#allocation7 + $0x4] sm:$0xf] %v259
    %292 = vst [vmem:[#allocation7 + $0x8] sm:$0xf] %v260
    %293 = vst [vmem:[#allocation7 + $0xc] sm:$0xf] %v261
    %294 = vst [vmem:[#allocation7 + $0x10] sm:$0xf] %v262
    %295 = vst [vmem:[#allocation7 + $0x14] sm:$0xf] %v263
    %296 = vst [vmem:[#allocation7 + $0x18] sm:$0xf] %v264
    %297 = vst [vmem:[#allocation7 + $0x1c] sm:$0xf] %v265
    %298 = vst [vmem:[#allocation7 + $0x20] sm:$0xf] %v266
    %299 = vst [vmem:[#allocation7 + $0x24] sm:$0xf] %v267
    %300 = vst [vmem:[#allocation7 + $0x28] sm:$0xf] %v268
    %301 = vst [vmem:[#allocation7 + $0x2c] sm:$0xf] %v269
    %302 = vst [vmem:[#allocation7 + $0x30] sm:$0xf] %v270
    %303 = vst [vmem:[#allocation7 + $0x34] sm:$0xf] %v271
    %304 = vst [vmem:[#allocation7 + $0x38] sm:$0xf] %v272
    %305 = vst [vmem:[#allocation7 + $0x3c] sm:$0xf] %v273
    // Predicated region
    $region18: #{tpu_custom_call.1} parent=1 // pred_check
      _
    $region19: #{tpu_custom_call.1} parent=1 // pred_check_branch
      %307 = sbr.rel (0) target = $region21
    $region20: #{tpu_custom_call.1} parent=1 // pred_region
      %s309 = ssub.s32 1024, 1024
      %310 = vsyncadd [#allocation4], %s309
      %s311 = sshll.u32 [#allocation7], 4
      %s312 = int_to_ptr.vmem [resolvable:$true] %s311
      %317 = dma.vmem_to_hbm [thread:$0]  %s312, 1024, %s2, [#allocation4], 64, 64, 4
    $region21: #{tpu_custom_call.1} parent=1 // pred_fallthru
      _
    // Predicated region
    $region22: #{tpu_custom_call.1} parent=1 // pred_check
      _
    $region23: #{tpu_custom_call.1} parent=1 // pred_check_branch
      %319 = sbr.rel (0) target = $region25
    $region24: #{tpu_custom_call.1} parent=1 // pred_region
      %320 = dma.done [#allocation4], 1024
    $region25: #{tpu_custom_call.1} parent=1 // pred_fallthru
      _
    %321 = vsyncpa [#allocation3], 1
    %322 = vsyncpa [#allocation6], 1
    %323 = vsyncpa [#allocation4], 1

</llo_original>
